<compile_context>
chip_gen: v6e
topology: v6e:2x2x1
jax: 0.10.0
libtpu: 0.0.40
codegen_flags: <defaults>
</compile_context>

<pallas_src>
import functools

import jax
import jax.numpy as jnp
from jax.experimental import pallas as pl
from jax.experimental.pallas import tpu as pltpu

NUM_OUT = 7      # real output columns: [rg_mu, log_rg_sigma, log_diff, sasa0, sasa1, re, log_re_sigma]
OUT_PAD = 128    # lane-dense padded output width (sliced back to 7 in the wrapper)


def _fnn_kernel(emb_ref, feats_ref,
                w1e_ref, w1f_ref, wh1_ref, wb2_ref, wout_ref, bias_ref,
                out_ref, *, S, H):
    f32 = jnp.float32

    emb = emb_ref[...]                      # [TB, input_dim]
    feats3 = feats_ref[:, 0:3]              # [TB, 3] (1/[1,10,100] already folded into w1f)

    biases = bias_ref[...]                  # [4, BW]
    b1 = biases[0:1, 0:S]
    bh1 = biases[1:2, 0:3 * H]
    bb2 = biases[2:3, 0:H]
    bout = biases[3:4, 0:OUT_PAD]

    # shared layer (concat-free: w1 split into embedding / feature parts)
    h = jnp.dot(emb, w1e_ref[...], preferred_element_type=f32)
    h = h + jnp.dot(feats3, w1f_ref[...], preferred_element_type=f32)
    h = jnp.maximum(h + b1, 0.0)            # [TB, S]   (Dropout == identity at eval)

    # fused first layer of the three heads: t = [a_hid | b_hid1 | c_hid]
    t = jnp.dot(h, wh1_ref[...], preferred_element_type=f32) + bh1
    t = jnp.maximum(t, 0.0)                 # [TB, 3H]

    # second hidden layer of the log_rg_re_sigma head
    b_hid2 = jnp.dot(t[:, H:2 * H], wb2_ref[...], preferred_element_type=f32) + bb2
    b_hid2 = jnp.maximum(b_hid2, 0.0)       # [TB, H]

    # all three head outputs + process_outputs reordering as one block-diagonal matmul
    w_out = wout_ref[...]                   # [4H, OUT_PAD]
    out = jnp.dot(t, w_out[0:3 * H, :], preferred_element_type=f32)
    out = out + jnp.dot(b_hid2, w_out[3 * H:4 * H, :], preferred_element_type=f32)
    out_ref[...] = out + bout               # [TB, OUT_PAD] lane-dense store


def new_config_fnn_v3_forward(polymer_embedding, polymer_feats, packed, *, S, H, tile_b=512):
    """Full NewConfigFNNV3 forward pass in a single Pallas kernel (batch-tiled)."""
    B, input_dim = polymer_embedding.shape
    n_feats = polymer_feats.shape[1]
    tb = B if B <= tile_b else tile_b       # full-array block for small B, else 512 (div by 8)
    grid = (pl.cdiv(B, tb),)

    emb = polymer_embedding.astype(jnp.float32)
    feats = polymer_feats.astype(jnp.float32)
    w1e, w1f, wh1, wb2, wout, biases = packed

    def const_spec(shape):
        # weights stay VMEM-resident across the batch grid (constant block index)
        return pl.BlockSpec(shape, lambda i: (0, 0))

    kern = functools.partial(_fnn_kernel, S=S, H=H)

    out_padded = pl.pallas_call(
        kern,
        out_shape=jax.ShapeDtypeStruct((B, OUT_PAD), jnp.float32),
        grid=grid,
        in_specs=[
            pl.BlockSpec((tb, input_dim), lambda i: (i, 0)),
            pl.BlockSpec((tb, n_feats), lambda i: (i, 0)),
            const_spec(w1e.shape),
            const_spec(w1f.shape),
            const_spec(wh1.shape),
            const_spec(wb2.shape),
            const_spec(wout.shape),
            const_spec(biases.shape),
        ],
        out_specs=pl.BlockSpec((tb, OUT_PAD), lambda i: (i, 0)),
        compiler_params=pltpu.CompilerParams(
            dimension_semantics=("parallel",),
            vmem_limit_bytes=32 * 1024 * 1024,
        ),
    )(emb, feats, w1e, w1f, wh1, wb2, wout, biases)

    return out_padded[:, :NUM_OUT]


# ----------------------------------------------------------------------------
# Parameter construction (PyTorch nn.Linear default init) + host-side packing.
# ----------------------------------------------------------------------------

def _linear_params(key, fan_in, fan_out):
    """nn.Linear default init: U(-1/sqrt(fan_in), 1/sqrt(fan_in)); weight stored [in, out]."""
    kw, kb = jax.random.split(key)
    bound = 1.0 / jnp.sqrt(fan_in)
    w = jax.random.uniform(kw, (fan_in, fan_out), jnp.float32, -bound, bound)
    b = jax.random.uniform(kb, (1, fan_out), jnp.float32, -bound, bound)
    return w, b


def make_params(key, input_dim, shared_layer_dim, hidden_dim):
    input_dim_fnn = input_dim + 3
    keys = jax.random.split(key, 8)
    w1, b1 = _linear_params(keys[0], input_dim_fnn, shared_layer_dim)
    wa1, ba1 = _linear_params(keys[1], shared_layer_dim, hidden_dim)
    wa2, ba2 = _linear_params(keys[2], hidden_dim, 4)
    wb1, bb1 = _linear_params(keys[3], shared_layer_dim, hidden_dim)
    wb2, bb2 = _linear_params(keys[4], hidden_dim, hidden_dim)
    wb3, bb3 = _linear_params(keys[5], hidden_dim, 2)
    wc1, bc1 = _linear_params(keys[6], shared_layer_dim, hidden_dim)
    wc2, bc2 = _linear_params(keys[7], hidden_dim, 1)
    return [w1, b1, wa1, ba1, wa2, ba2,
            wb1, bb1, wb2, bb2, wb3, bb3,
            wc1, bc1, wc2, bc2]


def pack_params(params, input_dim, S, H):
    """Fold/fuse the torch-layout params into the 6 arrays the kernel consumes."""
    (w1, b1, wa1, ba1, wa2, ba2,
     wb1, bb1, wb2, bb2, wb3, bb3,
     wc1, bc1, wc2, bc2) = params

    # (1) split w1 and fold the 1/[1,10,100] feature scaling into its feature rows
    inv_scale = jnp.array([1.0, 0.1, 0.01], jnp.float32)[:, None]      # [3, 1]
    w1_emb = w1[:input_dim, :]                                         # [input_dim, S]
    w1_feat = w1[input_dim:, :] * inv_scale                            # [3, S]

    # (2) fuse the first Linear of all three heads
    wh1 = jnp.concatenate([wa1, wb1, wc1], axis=1)                     # [S, 3H]
    bh1 = jnp.concatenate([ba1, bb1, bc1], axis=1)                     # [1, 3H]

    # (3) block-diagonal output weight with columns already in process_outputs order:
    #     [rg_mu, log_rg_sigma, log_diffusion, sasa0, sasa1, re, log_re_sigma]
    z = jnp.zeros((H, NUM_OUT), jnp.float32)
    w_a = (z.at[:, 0].set(wa2[:, 0]).at[:, 3].set(wa2[:, 1])
            .at[:, 4].set(wa2[:, 2]).at[:, 5].set(wa2[:, 3]))
    w_c = z.at[:, 2].set(wc2[:, 0])
    w_b = z.at[:, 1].set(wb3[:, 0]).at[:, 6].set(wb3[:, 1])
    w_out = jnp.concatenate(
        [w_a, jnp.zeros((H, NUM_OUT), jnp.float32), w_c, w_b], axis=0)  # [4H, 7]
    w_out = jnp.pad(w_out, ((0, 0), (0, OUT_PAD - NUM_OUT)))           # [4H, OUT_PAD]

    b_out = jnp.stack([ba2[0, 0], bb3[0, 0], bc2[0, 0],
                       ba2[0, 1], ba2[0, 2], ba2[0, 3], bb3[0, 1]])[None, :]
    b_out = jnp.pad(b_out, ((0, 0), (0, OUT_PAD - NUM_OUT)))           # [1, OUT_PAD]

    # (4) pack the remaining biases into a single [4, BW] array
    bw = max(S, 3 * H, OUT_PAD)
    bw = ((bw + 127) // 128) * 128
    pad = lambda b: jnp.pad(b, ((0, 0), (0, bw - b.shape[1])))
    biases = jnp.concatenate([pad(b1), pad(bh1), pad(bb2), pad(b_out)], axis=0)

    return [w1_emb, w1_feat, wh1, wb2, w_out, biases]


def reference_forward(polymer_embedding, polymer_feats, params):
    """Pure-JAX reference mirroring the PyTorch module (eval mode)."""
    (w1, b1, wa1, ba1, wa2, ba2,
     wb1, bb1, wb2, bb2, wb3, bb3,
     wc1, bc1, wc2, bc2) = params
    scale = jnp.array([1.0, 10.0, 100.0], jnp.float32)
    feats = polymer_feats[:, 0:3] / scale
    x = jnp.concatenate([polymer_embedding, feats], axis=-1)
    h = jax.nn.relu(x @ w1 + b1)
    a = jax.nn.relu(h @ wa1 + ba1) @ wa2 + ba2
    b = jax.nn.relu(h @ wb1 + bb1)
    b = jax.nn.relu(b @ wb2 + bb2)
    b = b @ wb3 + bb3
    c = jax.nn.relu(h @ wc1 + bc1) @ wc2 + bc2
    return jnp.concatenate(
        [a[:, 0:1], b[:, 0:1], c[:, 0:1], a[:, 1:3], a[:, 3:4], b[:, 1:2]], axis=-1)


if __name__ == "__main__":
    # Small, module-consistent shapes.
    B = 8
    input_dim = 29            # GNN embedding size -> input_dim_fnn = 32
    shared_layer_dim = 32
    hidden_dim = 32
    n_poly_feats = 5          # forward only uses the first 3 columns

    key = jax.random.PRNGKey(0)
    k_emb, k_feat, k_par = jax.random.split(key, 3)

    polymer_embedding = jax.random.normal(k_emb, (B, input_dim), jnp.float32)
    polymer_feats = jax.random.uniform(k_feat, (B, n_poly_feats), jnp.float32,
                                       minval=0.1, maxval=50.0)

    params = make_params(k_par, input_dim, shared_layer_dim, hidden_dim)
    packed = pack_params(params, input_dim, shared_layer_dim, hidden_dim)

    out = new_config_fnn_v3_forward(polymer_embedding, polymer_feats, packed,
                                    S=shared_layer_dim, H=hidden_dim)
    out = jax.block_until_ready(out)

    ref = reference_forward(polymer_embedding, polymer_feats, params)
    assert out.shape == (B, 7)
    assert jnp.allclose(out, ref, atol=1e-4, rtol=1e-4), (out, ref)

    print("KERNEL_OK")
</pallas_src>

<mosaic_0001>
module attributes {stable_mosaic.version = 11 : i64} {
  func.func @_fnn_kernel(%arg0: i32, %arg1: memref<8x29xf32, #tpu.memory_space<vmem>>, %arg2: memref<8x5xf32, #tpu.memory_space<vmem>>, %arg3: memref<29x32xf32, #tpu.memory_space<vmem>>, %arg4: memref<3x32xf32, #tpu.memory_space<vmem>>, %arg5: memref<32x96xf32, #tpu.memory_space<vmem>>, %arg6: memref<32x32xf32, #tpu.memory_space<vmem>>, %arg7: memref<128x128xf32, #tpu.memory_space<vmem>>, %arg8: memref<4x128xf32, #tpu.memory_space<vmem>>, %arg9: memref<8x128xf32, #tpu.memory_space<vmem>>) attributes {dimension_semantics = [#tpu.dimension_semantics<parallel>], iteration_bounds = array<i64: 1>, scalar_prefetch = 0 : i64, scratch_operands = 0 : i64, tpu.core_type = #tpu.core_type<tc>, window_params = [{transform_indices = @transform_0, window_bounds = array<i64: 8, 29>}, {transform_indices = @transform_1, window_bounds = array<i64: 8, 5>}, {pipeline_mode = #tpu.pipeline_mode<synchronous>, transform_indices = @transform_2, window_bounds = array<i64: 29, 32>}, {pipeline_mode = #tpu.pipeline_mode<synchronous>, transform_indices = @transform_3, window_bounds = array<i64: 3, 32>}, {pipeline_mode = #tpu.pipeline_mode<synchronous>, transform_indices = @transform_4, window_bounds = array<i64: 32, 96>}, {pipeline_mode = #tpu.pipeline_mode<synchronous>, transform_indices = @transform_5, window_bounds = array<i64: 32, 32>}, {pipeline_mode = #tpu.pipeline_mode<synchronous>, transform_indices = @transform_6, window_bounds = array<i64: 128, 128>}, {pipeline_mode = #tpu.pipeline_mode<synchronous>, transform_indices = @transform_7, window_bounds = array<i64: 4, 128>}, {transform_indices = @transform_8, window_bounds = array<i64: 8, 128>}]} {
    %c0 = arith.constant 0 : index
    %c0_0 = arith.constant 0 : index
    %0 = vector.load %arg1[%c0, %c0_0] : memref<8x29xf32, #tpu.memory_space<vmem>>, vector<8x29xf32>
    %c0_1 = arith.constant 0 : index
    %c0_2 = arith.constant 0 : index
    %1 = vector.load %arg2[%c0_1, %c0_2] : memref<8x5xf32, #tpu.memory_space<vmem>>, vector<8x3xf32>
    %c0_3 = arith.constant 0 : index
    %c0_4 = arith.constant 0 : index
    %2 = vector.load %arg8[%c0_3, %c0_4] : memref<4x128xf32, #tpu.memory_space<vmem>>, vector<4x128xf32>
    %3 = vector.extract_strided_slice %2 {offsets = [0, 0], sizes = [1, 32], strides = [1, 1]} : vector<4x128xf32> to vector<1x32xf32>
    %4 = vector.extract_strided_slice %2 {offsets = [1, 0], sizes = [1, 96], strides = [1, 1]} : vector<4x128xf32> to vector<1x96xf32>
    %5 = vector.extract_strided_slice %2 {offsets = [2, 0], sizes = [1, 32], strides = [1, 1]} : vector<4x128xf32> to vector<1x32xf32>
    %6 = vector.extract_strided_slice %2 {offsets = [3, 0], sizes = [1, 128], strides = [1, 1]} : vector<4x128xf32> to vector<1x128xf32>
    %c0_5 = arith.constant 0 : index
    %c0_6 = arith.constant 0 : index
    %7 = vector.load %arg3[%c0_5, %c0_6] : memref<29x32xf32, #tpu.memory_space<vmem>>, vector<29x32xf32>
    %cst = arith.constant dense<0.000000e+00> : vector<8x32xf32>
    %8 = tpu.matmul %0, %7, %cst {dimension_numbers = #tpu.dot_dimension_numbers<[1], [0], [0], [1], [0, 0, 1, 1], [], []>} : vector<8x29xf32>, vector<29x32xf32>, vector<8x32xf32> -> vector<8x32xf32>
    %c0_7 = arith.constant 0 : index
    %c0_8 = arith.constant 0 : index
    %9 = vector.load %arg4[%c0_7, %c0_8] : memref<3x32xf32, #tpu.memory_space<vmem>>, vector<3x32xf32>
    %cst_9 = arith.constant dense<0.000000e+00> : vector<8x32xf32>
    %10 = tpu.matmul %1, %9, %cst_9 {dimension_numbers = #tpu.dot_dimension_numbers<[1], [0], [0], [1], [0, 0, 1, 1], [], []>} : vector<8x3xf32>, vector<3x32xf32>, vector<8x32xf32> -> vector<8x32xf32>
    %11 = arith.addf %8, %10 : vector<8x32xf32>
    %12 = vector.broadcast %3 : vector<1x32xf32> to vector<8x32xf32>
    %13 = arith.addf %11, %12 : vector<8x32xf32>
    %cst_10 = arith.constant 0.000000e+00 : f32
    %14 = vector.broadcast %cst_10 : f32 to vector<8x32xf32>
    %15 = arith.maximumf %13, %14 : vector<8x32xf32>
    %c0_11 = arith.constant 0 : index
    %c0_12 = arith.constant 0 : index
    %16 = vector.load %arg5[%c0_11, %c0_12] : memref<32x96xf32, #tpu.memory_space<vmem>>, vector<32x96xf32>
    %cst_13 = arith.constant dense<0.000000e+00> : vector<8x96xf32>
    %17 = tpu.matmul %15, %16, %cst_13 {dimension_numbers = #tpu.dot_dimension_numbers<[1], [0], [0], [1], [0, 0, 1, 1], [], []>} : vector<8x32xf32>, vector<32x96xf32>, vector<8x96xf32> -> vector<8x96xf32>
    %18 = vector.broadcast %4 : vector<1x96xf32> to vector<8x96xf32>
    %19 = arith.addf %17, %18 : vector<8x96xf32>
    %cst_14 = arith.constant 0.000000e+00 : f32
    %20 = vector.broadcast %cst_14 : f32 to vector<8x96xf32>
    %21 = arith.maximumf %19, %20 : vector<8x96xf32>
    %22 = vector.extract_strided_slice %21 {offsets = [0, 32], sizes = [8, 32], strides = [1, 1]} : vector<8x96xf32> to vector<8x32xf32>
    %c0_15 = arith.constant 0 : index
    %c0_16 = arith.constant 0 : index
    %23 = vector.load %arg6[%c0_15, %c0_16] : memref<32x32xf32, #tpu.memory_space<vmem>>, vector<32x32xf32>
    %cst_17 = arith.constant dense<0.000000e+00> : vector<8x32xf32>
    %24 = tpu.matmul %22, %23, %cst_17 {dimension_numbers = #tpu.dot_dimension_numbers<[1], [0], [0], [1], [0, 0, 1, 1], [], []>} : vector<8x32xf32>, vector<32x32xf32>, vector<8x32xf32> -> vector<8x32xf32>
    %25 = vector.broadcast %5 : vector<1x32xf32> to vector<8x32xf32>
    %26 = arith.addf %24, %25 : vector<8x32xf32>
    %cst_18 = arith.constant 0.000000e+00 : f32
    %27 = vector.broadcast %cst_18 : f32 to vector<8x32xf32>
    %28 = arith.maximumf %26, %27 : vector<8x32xf32>
    %c0_19 = arith.constant 0 : index
    %c0_20 = arith.constant 0 : index
    %29 = vector.load %arg7[%c0_19, %c0_20] : memref<128x128xf32, #tpu.memory_space<vmem>>, vector<128x128xf32>
    %30 = vector.extract_strided_slice %29 {offsets = [0, 0], sizes = [96, 128], strides = [1, 1]} : vector<128x128xf32> to vector<96x128xf32>
    %cst_21 = arith.constant dense<0.000000e+00> : vector<8x128xf32>
    %31 = tpu.matmul %21, %30, %cst_21 {dimension_numbers = #tpu.dot_dimension_numbers<[1], [0], [0], [1], [0, 0, 1, 1], [], []>} : vector<8x96xf32>, vector<96x128xf32>, vector<8x128xf32> -> vector<8x128xf32>
    %32 = vector.extract_strided_slice %29 {offsets = [96, 0], sizes = [32, 128], strides = [1, 1]} : vector<128x128xf32> to vector<32x128xf32>
    %cst_22 = arith.constant dense<0.000000e+00> : vector<8x128xf32>
    %33 = tpu.matmul %28, %32, %cst_22 {dimension_numbers = #tpu.dot_dimension_numbers<[1], [0], [0], [1], [0, 0, 1, 1], [], []>} : vector<8x32xf32>, vector<32x128xf32>, vector<8x128xf32> -> vector<8x128xf32>
    %34 = arith.addf %31, %33 : vector<8x128xf32>
    %35 = vector.broadcast %6 : vector<1x128xf32> to vector<8x128xf32>
    %36 = arith.addf %34, %35 : vector<8x128xf32>
    %c0_23 = arith.constant 0 : index
    %c0_24 = arith.constant 0 : index
    %37 = vector.load %arg9[%c0_23, %c0_24] : memref<8x128xf32, #tpu.memory_space<vmem>>, vector<8x128xf32>
    tpu.vector_store %arg9[%c0_23, %c0_24], %36 {strides = array<i32>} : memref<8x128xf32, #tpu.memory_space<vmem>>, vector<8x128xf32>,
    return
  }
  func.func @transform_0(%arg0: i32) -> (i32, i32) {
    %c0_i32 = arith.constant 0 : i32
    %c0_i32_0 = arith.constant 0 : i32
    return %arg0, %c0_i32 : i32, i32
  }
  func.func @transform_1(%arg0: i32) -> (i32, i32) {
    %c0_i32 = arith.constant 0 : i32
    %c0_i32_0 = arith.constant 0 : i32
    return %arg0, %c0_i32 : i32, i32
  }
  func.func @transform_2(%arg0: i32) -> (i32, i32) {
    %c0_i32 = arith.constant 0 : i32
    %c0_i32_0 = arith.constant 0 : i32
    %c0_i32_1 = arith.constant 0 : i32
    return %c0_i32, %c0_i32_0 : i32, i32
  }
  func.func @transform_3(%arg0: i32) -> (i32, i32) {
    %c0_i32 = arith.constant 0 : i32
    %c0_i32_0 = arith.constant 0 : i32
    %c0_i32_1 = arith.constant 0 : i32
    return %c0_i32, %c0_i32_0 : i32, i32
  }
  func.func @transform_4(%arg0: i32) -> (i32, i32) {
    %c0_i32 = arith.constant 0 : i32
    %c0_i32_0 = arith.constant 0 : i32
    %c0_i32_1 = arith.constant 0 : i32
    return %c0_i32, %c0_i32_0 : i32, i32
  }
  func.func @transform_5(%arg0: i32) -> (i32, i32) {
    %c0_i32 = arith.constant 0 : i32
    %c0_i32_0 = arith.constant 0 : i32
    %c0_i32_1 = arith.constant 0 : i32
    return %c0_i32, %c0_i32_0 : i32, i32
  }
  func.func @transform_6(%arg0: i32) -> (i32, i32) {
    %c0_i32 = arith.constant 0 : i32
    %c0_i32_0 = arith.constant 0 : i32
    %c0_i32_1 = arith.constant 0 : i32
    return %c0_i32, %c0_i32_0 : i32, i32
  }
  func.func @transform_7(%arg0: i32) -> (i32, i32) {
    %c0_i32 = arith.constant 0 : i32
    %c0_i32_0 = arith.constant 0 : i32
    %c0_i32_1 = arith.constant 0 : i32
    return %c0_i32, %c0_i32_0 : i32, i32
  }
  func.func @transform_8(%arg0: i32) -> (i32, i32) {
    %c0_i32 = arith.constant 0 : i32
    %c0_i32_0 = arith.constant 0 : i32
    return %arg0, %c0_i32 : i32, i32
  }
}

</mosaic_0001>

<llo_original>
// kernel: tpu_custom_call.1
$region0: #{tpu_custom_call.1}
  #allocation0 [shape = 'u32[]', space=smem, size = 0x4, offset = 0x4, fixed_abs, tag = 'smem constant byte address 0x4 - core index']
  #allocation1 [shape = 'u32[144,128]{1,0:T(1,128)}', space=vmem, size = 0x12000, scoped, tag = 'internal scratch']
  %s0 = inlined_call_operand.hbm [shape: f32[8,29], index: 0, kind: input, shape index: {}]
  %s1 = inlined_call_operand.hbm [shape: f32[8,5], index: 1, kind: input, shape index: {}]
  %s2 = inlined_call_operand.hbm [shape: f32[29,32], index: 2, kind: input, shape index: {}]
  %s3 = inlined_call_operand.vmem [shape: f32[3,32], index: 3, kind: input, shape index: {}]
  %s4 = inlined_call_operand.hbm [shape: f32[32,96], index: 4, kind: input, shape index: {}]
  %s5 = inlined_call_operand.hbm [shape: f32[32,32], index: 5, kind: input, shape index: {}]
  %s6 = inlined_call_operand.hbm [shape: f32[128,128], index: 6, kind: input, shape index: {}]
  %s7 = inlined_call_operand.vmem [shape: f32[4,128], index: 7, kind: input, shape index: {}]
  %s8 = inlined_call_operand.hbm [shape: f32[8,128], index: 8, kind: output, shape index: {}]
  %s9 = sld [smem:[#allocation0]]
  $region66: #{tpu_custom_call.1} parent=0
    _
  %s11 = ssub.s32 1, %s9
  %s12 = scalar_select 0, %s11, %s9
  $region1: #{tpu_custom_call.1} parent=0
    #allocation2 [shape = 'u8[4096]{0}', space=vmem, size = 0x1000, scoped, tag = 'input window, operand 0, single buffered']
    #allocation3 [shape = 's32[1]{0}', space=sflag, size = 0x4, scoped, tag = 'scoped memory for tpu_custom_call.1']
    #allocation4 [shape = 's32[1]{0}', space=sflag, size = 0x4, scoped, tag = 'scoped memory for tpu_custom_call.1']
    #allocation5 [shape = 'u8[4096]{0}', space=vmem, size = 0x1000, scoped, tag = 'input window, operand 1, single buffered']
    #allocation6 [shape = 's32[1]{0}', space=sflag, size = 0x4, scoped, tag = 'scoped memory for tpu_custom_call.1']
    #allocation7 [shape = 'u8[16384]{0}', space=vmem, size = 0x4000, scoped, tag = 'input window, operand 2, single buffered']
    #allocation8 [shape = 'u8[16384]{0}', space=vmem, size = 0x4000, scoped, tag = 'input window, operand 4, single buffered']
    #allocation9 [shape = 's32[1]{0}', space=sflag, size = 0x4, scoped, tag = 'scoped memory for tpu_custom_call.1']
    #allocation10 [shape = 'u8[16384]{0}', space=vmem, size = 0x4000, scoped, tag = 'input window, operand 5, single buffered']
    #allocation11 [shape = 'u8[65536]{0}', space=vmem, size = 0x10000, scoped, tag = 'input window, operand 6, single buffered']
    #allocation12 [shape = 's32[1]{0}', space=sflag, size = 0x4, scoped, tag = 'scoped memory for tpu_custom_call.1']
    #allocation13 [shape = 'u8[4096]{0}', space=vmem, size = 0x1000, scoped, tag = 'output window, operand 0, single buffered']
    %13 = vsyncpa [#allocation3], 0
    %14 = vsyncpa [#allocation6], 0
    %15 = vsyncpa [#allocation9], 0
    %16 = vsyncpa [#allocation12], 0
    %17 = vsyncpa [#allocation4], 0
    // Predicated region
    $region2: #{tpu_custom_call.1} parent=1 // pred_check
      _
    $region3: #{tpu_custom_call.1} parent=1 // pred_check_branch
      %19 = sbr.rel (0) target = $region5
    $region4: #{tpu_custom_call.1} parent=1 // pred_region
      %s21 = ssub.s32 128, 128
      %22 = vsyncadd [#allocation3], %s21
      %s24 = sshll.u32 [#allocation2], 4
      %s25 = int_to_ptr.vmem [resolvable:$true] %s24
      %27 = dma.hbm_to_vmem [thread:$0]  %s0, 128, %s25, [#allocation3]
    $region5: #{tpu_custom_call.1} parent=1 // pred_fallthru
      _
    // Predicated region
    $region6: #{tpu_custom_call.1} parent=1 // pred_check
      _
    $region7: #{tpu_custom_call.1} parent=1 // pred_check_branch
      %29 = sbr.rel (0) target = $region9
    $region8: #{tpu_custom_call.1} parent=1 // pred_region
      %s31 = ssub.s32 128, 128
      %32 = vsyncadd [#allocation6], %s31
      %s34 = sshll.u32 [#allocation5], 4
      %s35 = int_to_ptr.vmem [resolvable:$true] %s34
      %37 = dma.hbm_to_vmem [thread:$0]  %s1, 128, %s35, [#allocation6]
    $region9: #{tpu_custom_call.1} parent=1 // pred_fallthru
      _
    // Predicated region
    $region10: #{tpu_custom_call.1} parent=1 // pred_check
      _
    $region11: #{tpu_custom_call.1} parent=1 // pred_check_branch
      %39 = sbr.rel (0) target = $region13
    $region12: #{tpu_custom_call.1} parent=1 // pred_region
      %s41 = ssub.s32 512, 512
      %42 = vsyncadd [#allocation6], %s41
      %s43 = sshll.u32 [#allocation7], 4
      %s44 = int_to_ptr.vmem [resolvable:$true] %s43
      %49 = dma.hbm_to_vmem [thread:$0]  %s2, 512, %s44, [#allocation6], 128, 128, 8
    $region13: #{tpu_custom_call.1} parent=1 // pred_fallthru
      _
    // Predicated region
    $region14: #{tpu_custom_call.1} parent=1 // pred_check
      _
    $region15: #{tpu_custom_call.1} parent=1 // pred_check_branch
      %51 = sbr.rel (0) target = $region17
    $region16: #{tpu_custom_call.1} parent=1 // pred_region
      _
    $region17: #{tpu_custom_call.1} parent=1 // pred_fallthru
      _
    // Predicated region
    $region18: #{tpu_custom_call.1} parent=1 // pred_check
      _
    $region19: #{tpu_custom_call.1} parent=1 // pred_check_branch
      %53 = sbr.rel (0) target = $region21
    $region20: #{tpu_custom_call.1} parent=1 // pred_region
      %s55 = ssub.s32 512, 512
      %56 = vsyncadd [#allocation9], %s55
      %s57 = sshll.u32 [#allocation8], 4
      %s58 = int_to_ptr.vmem [resolvable:$true] %s57
      %63 = dma.hbm_to_vmem [thread:$0]  %s4, 512, %s58, [#allocation9], 128, 128, 8
    $region21: #{tpu_custom_call.1} parent=1 // pred_fallthru
      _
    // Predicated region
    $region22: #{tpu_custom_call.1} parent=1 // pred_check
      _
    $region23: #{tpu_custom_call.1} parent=1 // pred_check_branch
      %65 = sbr.rel (0) target = $region25
    $region24: #{tpu_custom_call.1} parent=1 // pred_region
      %s67 = ssub.s32 512, 512
      %68 = vsyncadd [#allocation9], %s67
      %s69 = sshll.u32 [#allocation10], 4
      %s70 = int_to_ptr.vmem [resolvable:$true] %s69
      %75 = dma.hbm_to_vmem [thread:$0]  %s5, 512, %s70, [#allocation9], 128, 128, 8
    $region25: #{tpu_custom_call.1} parent=1 // pred_fallthru
      _
    // Predicated region
    $region26: #{tpu_custom_call.1} parent=1 // pred_check
      _
    $region27: #{tpu_custom_call.1} parent=1 // pred_check_branch
      %77 = sbr.rel (0) target = $region29
    $region28: #{tpu_custom_call.1} parent=1 // pred_region
      %s79 = ssub.s32 2048, 2048
      %80 = vsyncadd [#allocation12], %s79
      %s81 = sshll.u32 [#allocation11], 4
      %s82 = int_to_ptr.vmem [resolvable:$true] %s81
      %87 = dma.hbm_to_vmem [thread:$0]  %s6, 2048, %s82, [#allocation12], 128, 128, 8
    $region29: #{tpu_custom_call.1} parent=1 // pred_fallthru
      _
    // Predicated region
    $region30: #{tpu_custom_call.1} parent=1 // pred_check
      _
    $region31: #{tpu_custom_call.1} parent=1 // pred_check_branch
      %89 = sbr.rel (0) target = $region33
    $region32: #{tpu_custom_call.1} parent=1 // pred_region
      _
    $region33: #{tpu_custom_call.1} parent=1 // pred_fallthru
      _
    // Predicated region
    $region34: #{tpu_custom_call.1} parent=1 // pred_check
      _
    $region35: #{tpu_custom_call.1} parent=1 // pred_check_branch
      %91 = sbr.rel (0) target = $region37
    $region36: #{tpu_custom_call.1} parent=1 // pred_region
      %92 = dma.done [#allocation3], 128
    $region37: #{tpu_custom_call.1} parent=1 // pred_fallthru
      _
    // Predicated region
    $region38: #{tpu_custom_call.1} parent=1 // pred_check
      _
    $region39: #{tpu_custom_call.1} parent=1 // pred_check_branch
      %94 = sbr.rel (0) target = $region41
    $region40: #{tpu_custom_call.1} parent=1 // pred_region
      %95 = dma.done [#allocation6], 128
    $region41: #{tpu_custom_call.1} parent=1 // pred_fallthru
      _
    // Predicated region
    $region42: #{tpu_custom_call.1} parent=1 // pred_check
      _
    $region43: #{tpu_custom_call.1} parent=1 // pred_check_branch
      %97 = sbr.rel (0) target = $region45
    $region44: #{tpu_custom_call.1} parent=1 // pred_region
      %98 = dma.done [#allocation6], 512
    $region45: #{tpu_custom_call.1} parent=1 // pred_fallthru
      _
    // Predicated region
    $region46: #{tpu_custom_call.1} parent=1 // pred_check
      _
    $region47: #{tpu_custom_call.1} parent=1 // pred_check_branch
      %100 = sbr.rel (0) target = $region49
    $region48: #{tpu_custom_call.1} parent=1 // pred_region
      %101 = dma.done [#allocation9], 512
    $region49: #{tpu_custom_call.1} parent=1 // pred_fallthru
      _
    // Predicated region
    $region50: #{tpu_custom_call.1} parent=1 // pred_check
      _
    $region51: #{tpu_custom_call.1} parent=1 // pred_check_branch
      %103 = sbr.rel (0) target = $region53
    $region52: #{tpu_custom_call.1} parent=1 // pred_region
      %104 = dma.done [#allocation9], 512
    $region53: #{tpu_custom_call.1} parent=1 // pred_fallthru
      _
    // Predicated region
    $region54: #{tpu_custom_call.1} parent=1 // pred_check
      _
    $region55: #{tpu_custom_call.1} parent=1 // pred_check_branch
      %106 = sbr.rel (0) target = $region57
    $region56: #{tpu_custom_call.1} parent=1 // pred_region
      %107 = dma.done [#allocation12], 2048
    $region57: #{tpu_custom_call.1} parent=1 // pred_fallthru
      _
    %v108 = vld [vmem:[#allocation2] sm:$0xff]
    %v109 = vld [vmem:[#allocation5] sm:$0xff]
    %v110 = vld [vmem:[%s7] sm:$0xf]
    %v111 = vld [vmem:[#allocation7] sm:$0xff]
    %v112 = vld [vmem:[#allocation7 + $0x8] sm:$0xff]
    %v113 = vld [vmem:[#allocation7 + $0x10] sm:$0xff]
    %v114 = vld [vmem:[#allocation7 + $0x18] sm:$0x1f]
    %v115 = vld [vmem:[%s3] sm:$0x7]
    %vm116 = vcmask 23552
    %v118 = vsel %vm116, %v109, 0
    %vm120 = vcmask 1042432
    %v122 = vsel %vm120, %v115, 0
    %124 = vmatprep.subr.mxu0 0.0
    %125 = vmatpush1.msra.mxu0 0.0
    %126 = vmatprep.subr.mxu0 0.0
    %127 = vmatpush1.msra.mxu0 0.0
    %128 = vmatprep.subr.mxu0 0.0
    %129 = vmatpush1.msra.mxu0 0.0
    %130 = vmatprep.subr.mxu0 0.0
    %131 = vmatpush1.msra.mxu0 0.0
    %132 = vmatprep.subr.mxu0 0.0
    %133 = vmatpush1.msra.mxu0 0.0
    %134 = vmatprep.subr.mxu0 0.0
    %135 = vmatpush1.msra.mxu0 0.0
    %136 = vmatprep.subr.mxu0 0.0
    %137 = vmatpush1.msra.mxu0 0.0
    %138 = vmatprep.subr.mxu0 0.0
    %139 = vmatpush1.msra.mxu0 0.0
    %140 = vmatprep.subr.mxu0 0.0
    %141 = vmatpush1.msra.mxu0 0.0
    %142 = vmatprep.subr.mxu0 0.0
    %143 = vmatpush1.msra.mxu0 0.0
    %144 = vmatprep.subr.mxu0 0.0
    %145 = vmatpush1.msra.mxu0 0.0
    %146 = vmatprep.subr.mxu0 0.0
    %147 = vmatpush1.msra.mxu0 0.0
    %148 = vmatprep.subr.mxu0 0.0
    %149 = vmatpush1.msra.mxu0 0.0
    %150 = vmatprep.subr.mxu0 0.0
    %151 = vmatpush1.msra.mxu0 0.0
    %152 = vmatprep.subr.mxu0 0.0
    %153 = vmatpush1.msra.mxu0 0.0
    %154 = vmatprep.subr.mxu0 0.0
    %155 = vmatpush1.msra.mxu0 %v122
    %156 = vmatprep.subr.mxu0 0.0
    %157 = vmatpush2.msra.mxu0 0.0
    %158 = vmatprep.subr.mxu0 0.0
    %159 = vmatpush2.msra.mxu0 0.0
    %160 = vmatprep.subr.mxu0 0.0
    %161 = vmatpush2.msra.mxu0 0.0
    %162 = vmatprep.subr.mxu0 0.0
    %163 = vmatpush2.msra.mxu0 0.0
    %164 = vmatprep.subr.mxu0 0.0
    %165 = vmatpush2.msra.mxu0 0.0
    %166 = vmatprep.subr.mxu0 0.0
    %167 = vmatpush2.msra.mxu0 0.0
    %168 = vmatprep.subr.mxu0 0.0
    %169 = vmatpush2.msra.mxu0 0.0
    %170 = vmatprep.subr.mxu0 0.0
    %171 = vmatpush2.msra.mxu0 0.0
    %172 = vmatprep.subr.mxu0 0.0
    %173 = vmatpush2.msra.mxu0 0.0
    %174 = vmatprep.subr.mxu0 0.0
    %175 = vmatpush2.msra.mxu0 0.0
    %176 = vmatprep.subr.mxu0 0.0
    %177 = vmatpush2.msra.mxu0 0.0
    %178 = vmatprep.subr.mxu0 0.0
    %179 = vmatpush2.msra.mxu0 0.0
    %180 = vmatprep.subr.mxu0 0.0
    %181 = vmatpush2.msra.mxu0 0.0
    %182 = vmatprep.subr.mxu0 0.0
    %183 = vmatpush2.msra.mxu0 0.0
    %184 = vmatprep.subr.mxu0 0.0
    %185 = vmatpush2.msra.mxu0 0.0
    %186 = vmatprep.subr.mxu0 0.0
    %187 = vmatpush2.msra.mxu0 0.0
    %188 = vmatprep.mubr.f32.mxu0 0.0
    %189 = vmatmul.mubr.f32.gmra.mxu0 %v118
    %v190 = vpop.f32.mrf.mxu0
    %v191 = vadd.f32 0.0, %v190
    %v192 = vpop.f32.mrf.mxu0
    %193 = vdwg.mxu0
    %vm194 = vcmask 236544
    %v196 = vsel %vm194, %v108, 0
    %vm198 = vcmask 1044480
    %v200 = vsel %vm198, %v114, 0
    %202 = vmatprep.subr.mxu0 0.0
    %203 = vmatpush1.msra.mxu0 0.0
    %204 = vmatprep.subr.mxu0 0.0
    %205 = vmatpush1.msra.mxu0 0.0
    %206 = vmatprep.subr.mxu0 0.0
    %207 = vmatpush1.msra.mxu0 0.0
    %208 = vmatprep.subr.mxu0 0.0
    %209 = vmatpush1.msra.mxu0 0.0
    %210 = vmatprep.subr.mxu0 0.0
    %211 = vmatpush1.msra.mxu0 0.0
    %212 = vmatprep.subr.mxu0 0.0
    %213 = vmatpush1.msra.mxu0 0.0
    %214 = vmatprep.subr.mxu0 0.0
    %215 = vmatpush1.msra.mxu0 0.0
    %216 = vmatprep.subr.mxu0 0.0
    %217 = vmatpush1.msra.mxu0 0.0
    %218 = vmatprep.subr.mxu0 0.0
    %219 = vmatpush1.msra.mxu0 0.0
    %220 = vmatprep.subr.mxu0 0.0
    %221 = vmatpush1.msra.mxu0 0.0
    %222 = vmatprep.subr.mxu0 0.0
    %223 = vmatpush1.msra.mxu0 0.0
    %224 = vmatprep.subr.mxu0 0.0
    %225 = vmatpush1.msra.mxu0 0.0
    %226 = vmatprep.subr.mxu0 0.0
    %227 = vmatpush1.msra.mxu0 %v200
    %228 = vmatprep.subr.mxu0 0.0
    %229 = vmatpush1.msra.mxu0 %v113
    %230 = vmatprep.subr.mxu0 0.0
    %231 = vmatpush1.msra.mxu0 %v112
    %232 = vmatprep.subr.mxu0 0.0
    %233 = vmatpush1.msra.mxu0 %v111
    %234 = vmatprep.subr.mxu0 0.0
    %235 = vmatpush2.msra.mxu0 0.0
    %236 = vmatprep.subr.mxu0 0.0
    %237 = vmatpush2.msra.mxu0 0.0
    %238 = vmatprep.subr.mxu0 0.0
    %239 = vmatpush2.msra.mxu0 0.0
    %240 = vmatprep.subr.mxu0 0.0
    %241 = vmatpush2.msra.mxu0 0.0
    %242 = vmatprep.subr.mxu0 0.0
    %243 = vmatpush2.msra.mxu0 0.0
    %244 = vmatprep.subr.mxu0 0.0
    %245 = vmatpush2.msra.mxu0 0.0
    %246 = vmatprep.subr.mxu0 0.0
    %247 = vmatpush2.msra.mxu0 0.0
    %248 = vmatprep.subr.mxu0 0.0
    %249 = vmatpush2.msra.mxu0 0.0
    %250 = vmatprep.subr.mxu0 0.0
    %251 = vmatpush2.msra.mxu0 0.0
    %252 = vmatprep.subr.mxu0 0.0
    %253 = vmatpush2.msra.mxu0 0.0
    %254 = vmatprep.subr.mxu0 0.0
    %255 = vmatpush2.msra.mxu0 0.0
    %256 = vmatprep.subr.mxu0 0.0
    %257 = vmatpush2.msra.mxu0 0.0
    %258 = vmatprep.subr.mxu0 0.0
    %259 = vmatpush2.msra.mxu0 0.0
    %260 = vmatprep.subr.mxu0 0.0
    %261 = vmatpush2.msra.mxu0 0.0
    %262 = vmatprep.subr.mxu0 0.0
    %263 = vmatpush2.msra.mxu0 0.0
    %264 = vmatprep.subr.mxu0 0.0
    %265 = vmatpush2.msra.mxu0 0.0
    %266 = vmatprep.mubr.f32.mxu0 0.0
    %267 = vmatmul.mubr.f32.gmra.mxu0 %v196
    %v268 = vpop.f32.mrf.mxu0
    %v269 = vadd.f32 %v191, %v268
    %v270 = vpop.f32.mrf.mxu0
    %271 = vdwg.mxu0
    %v272 = vlaneseq
    %v273 = vshrl.u32 %v272, 7
    %v274 = vsub.s32 0, %v273
    %v275 = vrot.slane %v110, %v274
    %v276 = vadd.f32 %v269, %v275
    %v277 = vmax.f32 %v276, 0.0
    %v278 = vld [vmem:[#allocation8] sm:$0xff]
    %v279 = vld [vmem:[#allocation8 + $0x8] sm:$0xff]
    %v280 = vld [vmem:[#allocation8 + $0x10] sm:$0xff]
    %v281 = vld [vmem:[#allocation8 + $0x18] sm:$0xff]
    %v282 = vlaneseq
    %v283 = vshrl.u32 %v282, 7
    %v284 = vsub.s32 1, %v283
    %v285 = vrot.slane %v110, %v284
    %vm286 = vcmask 261120
    %v288 = vsel %vm286, %v277, 0
    %290 = vmatprep.subr.mxu0 0.0
    %291 = vmatpush1.msra.mxu0 0.0
    %292 = vmatprep.subr.mxu0 0.0
    %293 = vmatpush1.msra.mxu0 0.0
    %294 = vmatprep.subr.mxu0 0.0
    %295 = vmatpush1.msra.mxu0 0.0
    %296 = vmatprep.subr.mxu0 0.0
    %297 = vmatpush1.msra.mxu0 0.0
    %298 = vmatprep.subr.mxu0 0.0
    %299 = vmatpush1.msra.mxu0 0.0
    %300 = vmatprep.subr.mxu0 0.0
    %301 = vmatpush1.msra.mxu0 0.0
    %302 = vmatprep.subr.mxu0 0.0
    %303 = vmatpush1.msra.mxu0 0.0
    %304 = vmatprep.subr.mxu0 0.0
    %305 = vmatpush1.msra.mxu0 0.0
    %306 = vmatprep.subr.mxu0 0.0
    %307 = vmatpush1.msra.mxu0 0.0
    %308 = vmatprep.subr.mxu0 0.0
    %309 = vmatpush1.msra.mxu0 0.0
    %310 = vmatprep.subr.mxu0 0.0
    %311 = vmatpush1.msra.mxu0 0.0
    %312 = vmatprep.subr.mxu0 0.0
    %313 = vmatpush1.msra.mxu0 0.0
    %314 = vmatprep.subr.mxu0 0.0
    %315 = vmatpush1.msra.mxu0 %v281
    %316 = vmatprep.subr.mxu0 0.0
    %317 = vmatpush1.msra.mxu0 %v280
    %318 = vmatprep.subr.mxu0 0.0
    %319 = vmatpush1.msra.mxu0 %v279
    %320 = vmatprep.subr.mxu0 0.0
    %321 = vmatpush1.msra.mxu0 %v278
    %322 = vmatprep.subr.mxu0 0.0
    %323 = vmatpush2.msra.mxu0 0.0
    %324 = vmatprep.subr.mxu0 0.0
    %325 = vmatpush2.msra.mxu0 0.0
    %326 = vmatprep.subr.mxu0 0.0
    %327 = vmatpush2.msra.mxu0 0.0
    %328 = vmatprep.subr.mxu0 0.0
    %329 = vmatpush2.msra.mxu0 0.0
    %330 = vmatprep.subr.mxu0 0.0
    %331 = vmatpush2.msra.mxu0 0.0
    %332 = vmatprep.subr.mxu0 0.0
    %333 = vmatpush2.msra.mxu0 0.0
    %334 = vmatprep.subr.mxu0 0.0
    %335 = vmatpush2.msra.mxu0 0.0
    %336 = vmatprep.subr.mxu0 0.0
    %337 = vmatpush2.msra.mxu0 0.0
    %338 = vmatprep.subr.mxu0 0.0
    %339 = vmatpush2.msra.mxu0 0.0
    %340 = vmatprep.subr.mxu0 0.0
    %341 = vmatpush2.msra.mxu0 0.0
    %342 = vmatprep.subr.mxu0 0.0
    %343 = vmatpush2.msra.mxu0 0.0
    %344 = vmatprep.subr.mxu0 0.0
    %345 = vmatpush2.msra.mxu0 0.0
    %346 = vmatprep.subr.mxu0 0.0
    %347 = vmatpush2.msra.mxu0 0.0
    %348 = vmatprep.subr.mxu0 0.0
    %349 = vmatpush2.msra.mxu0 0.0
    %350 = vmatprep.subr.mxu0 0.0
    %351 = vmatpush2.msra.mxu0 0.0
    %352 = vmatprep.subr.mxu0 0.0
    %353 = vmatpush2.msra.mxu0 0.0
    %354 = vmatprep.mubr.f32.mxu0 0.0
    %355 = vmatmul.mubr.f32.gmra.mxu0 %v288
    %v356 = vpop.f32.mrf.mxu0
    %v357 = vadd.f32 %v285, %v356
    %v358 = vpop.f32.mrf.mxu0
    %359 = vdwg.mxu0
    %v360 = vmax.f32 %v357, 0.0
    %v361 = vld [vmem:[#allocation10] sm:$0xff]
    %v362 = vld [vmem:[#allocation10 + $0x8] sm:$0xff]
    %v363 = vld [vmem:[#allocation10 + $0x10] sm:$0xff]
    %v364 = vld [vmem:[#allocation10 + $0x18] sm:$0xff]
    %v365 = vlaneseq
    %v366 = vshrl.u32 %v365, 7
    %v367 = vsub.s32 2, %v366
    %v368 = vrot.slane %v110, %v367
    %370 = vrot.lane.b32.xlu0 %v360, 96
    %v371 = vpop.permute.xlu0 %370
    %v372 = vsel %vm286, %v371, 0
    %374 = vmatprep.subr.mxu0 0.0
    %375 = vmatpush1.msra.mxu0 0.0
    %376 = vmatprep.subr.mxu0 0.0
    %377 = vmatpush1.msra.mxu0 0.0
    %378 = vmatprep.subr.mxu0 0.0
    %379 = vmatpush1.msra.mxu0 0.0
    %380 = vmatprep.subr.mxu0 0.0
    %381 = vmatpush1.msra.mxu0 0.0
    %382 = vmatprep.subr.mxu0 0.0
    %383 = vmatpush1.msra.mxu0 0.0
    %384 = vmatprep.subr.mxu0 0.0
    %385 = vmatpush1.msra.mxu0 0.0
    %386 = vmatprep.subr.mxu0 0.0
    %387 = vmatpush1.msra.mxu0 0.0
    %388 = vmatprep.subr.mxu0 0.0
    %389 = vmatpush1.msra.mxu0 0.0
    %390 = vmatprep.subr.mxu0 0.0
    %391 = vmatpush1.msra.mxu0 0.0
    %392 = vmatprep.subr.mxu0 0.0
    %393 = vmatpush1.msra.mxu0 0.0
    %394 = vmatprep.subr.mxu0 0.0
    %395 = vmatpush1.msra.mxu0 0.0
    %396 = vmatprep.subr.mxu0 0.0
    %397 = vmatpush1.msra.mxu0 0.0
    %398 = vmatprep.subr.mxu0 0.0
    %399 = vmatpush1.msra.mxu0 %v364
    %400 = vmatprep.subr.mxu0 0.0
    %401 = vmatpush1.msra.mxu0 %v363
    %402 = vmatprep.subr.mxu0 0.0
    %403 = vmatpush1.msra.mxu0 %v362
    %404 = vmatprep.subr.mxu0 0.0
    %405 = vmatpush1.msra.mxu0 %v361
    %406 = vmatprep.subr.mxu0 0.0
    %407 = vmatpush2.msra.mxu0 0.0
    %408 = vmatprep.subr.mxu0 0.0
    %409 = vmatpush2.msra.mxu0 0.0
    %410 = vmatprep.subr.mxu0 0.0
    %411 = vmatpush2.msra.mxu0 0.0
    %412 = vmatprep.subr.mxu0 0.0
    %413 = vmatpush2.msra.mxu0 0.0
    %414 = vmatprep.subr.mxu0 0.0
    %415 = vmatpush2.msra.mxu0 0.0
    %416 = vmatprep.subr.mxu0 0.0
    %417 = vmatpush2.msra.mxu0 0.0
    %418 = vmatprep.subr.mxu0 0.0
    %419 = vmatpush2.msra.mxu0 0.0
    %420 = vmatprep.subr.mxu0 0.0
    %421 = vmatpush2.msra.mxu0 0.0
    %422 = vmatprep.subr.mxu0 0.0
    %423 = vmatpush2.msra.mxu0 0.0
    %424 = vmatprep.subr.mxu0 0.0
    %425 = vmatpush2.msra.mxu0 0.0
    %426 = vmatprep.subr.mxu0 0.0
    %427 = vmatpush2.msra.mxu0 0.0
    %428 = vmatprep.subr.mxu0 0.0
    %429 = vmatpush2.msra.mxu0 0.0
    %430 = vmatprep.subr.mxu0 0.0
    %431 = vmatpush2.msra.mxu0 0.0
    %432 = vmatprep.subr.mxu0 0.0
    %433 = vmatpush2.msra.mxu0 0.0
    %434 = vmatprep.subr.mxu0 0.0
    %435 = vmatpush2.msra.mxu0 0.0
    %436 = vmatprep.subr.mxu0 0.0
    %437 = vmatpush2.msra.mxu0 0.0
    %438 = vmatprep.mubr.f32.mxu0 0.0
    %439 = vmatmul.mubr.f32.gmra.mxu0 %v372
    %v440 = vpop.f32.mrf.mxu0
    %v441 = vadd.f32 %v368, %v440
    %v442 = vpop.f32.mrf.mxu0
    %443 = vdwg.mxu0
    %v444 = vmax.f32 %v441, 0.0
    %v445 = vld [vmem:[#allocation11] sm:$0xff]
    %v446 = vld [vmem:[#allocation11 + $0x8] sm:$0xff]
    %v447 = vld [vmem:[#allocation11 + $0x10] sm:$0xff]
    %v448 = vld [vmem:[#allocation11 + $0x18] sm:$0xff]
    %v449 = vld [vmem:[#allocation11 + $0x20] sm:$0xff]
    %v450 = vld [vmem:[#allocation11 + $0x28] sm:$0xff]
    %v451 = vld [vmem:[#allocation11 + $0x30] sm:$0xff]
    %v452 = vld [vmem:[#allocation11 + $0x38] sm:$0xff]
    %v453 = vld [vmem:[#allocation11 + $0x40] sm:$0xff]
    %v454 = vld [vmem:[#allocation11 + $0x48] sm:$0xff]
    %v455 = vld [vmem:[#allocation11 + $0x50] sm:$0xff]
    %v456 = vld [vmem:[#allocation11 + $0x58] sm:$0xff]
    %v457 = vld [vmem:[#allocation11 + $0x60] sm:$0xff]
    %v458 = vld [vmem:[#allocation11 + $0x68] sm:$0xff]
    %v459 = vld [vmem:[#allocation11 + $0x70] sm:$0xff]
    %v460 = vld [vmem:[#allocation11 + $0x78] sm:$0xff]
    %v462 = vsel %vm286, %v444, 0
    %464 = vmatprep.subr.mxu0 0.0
    %465 = vmatpush1.msra.mxu0 0.0
    %466 = vmatprep.subr.mxu0 0.0
    %467 = vmatpush1.msra.mxu0 0.0
    %468 = vmatprep.subr.mxu0 0.0
    %469 = vmatpush1.msra.mxu0 0.0
    %470 = vmatprep.subr.mxu0 0.0
    %471 = vmatpush1.msra.mxu0 0.0
    %472 = vmatprep.subr.mxu0 0.0
    %473 = vmatpush1.msra.mxu0 0.0
    %474 = vmatprep.subr.mxu0 0.0
    %475 = vmatpush1.msra.mxu0 0.0
    %476 = vmatprep.subr.mxu0 0.0
    %477 = vmatpush1.msra.mxu0 0.0
    %478 = vmatprep.subr.mxu0 0.0
    %479 = vmatpush1.msra.mxu0 0.0
    %480 = vmatprep.subr.mxu0 0.0
    %481 = vmatpush1.msra.mxu0 0.0
    %482 = vmatprep.subr.mxu0 0.0
    %483 = vmatpush1.msra.mxu0 0.0
    %484 = vmatprep.subr.mxu0 0.0
    %485 = vmatpush1.msra.mxu0 0.0
    %486 = vmatprep.subr.mxu0 0.0
    %487 = vmatpush1.msra.mxu0 0.0
    %488 = vmatprep.subr.mxu0 0.0
    %489 = vmatpush1.msra.mxu0 %v460
    %490 = vmatprep.subr.mxu0 0.0
    %491 = vmatpush1.msra.mxu0 %v459
    %492 = vmatprep.subr.mxu0 0.0
    %493 = vmatpush1.msra.mxu0 %v458
    %494 = vmatprep.subr.mxu0 0.0
    %495 = vmatpush1.msra.mxu0 %v457
    %496 = vmatprep.subr.mxu0 0.0
    %497 = vmatpush2.msra.mxu0 0.0
    %498 = vmatprep.subr.mxu0 0.0
    %499 = vmatpush2.msra.mxu0 0.0
    %500 = vmatprep.subr.mxu0 0.0
    %501 = vmatpush2.msra.mxu0 0.0
    %502 = vmatprep.subr.mxu0 0.0
    %503 = vmatpush2.msra.mxu0 0.0
    %504 = vmatprep.subr.mxu0 0.0
    %505 = vmatpush2.msra.mxu0 0.0
    %506 = vmatprep.subr.mxu0 0.0
    %507 = vmatpush2.msra.mxu0 0.0
    %508 = vmatprep.subr.mxu0 0.0
    %509 = vmatpush2.msra.mxu0 0.0
    %510 = vmatprep.subr.mxu0 0.0
    %511 = vmatpush2.msra.mxu0 0.0
    %512 = vmatprep.subr.mxu0 0.0
    %513 = vmatpush2.msra.mxu0 0.0
    %514 = vmatprep.subr.mxu0 0.0
    %515 = vmatpush2.msra.mxu0 0.0
    %516 = vmatprep.subr.mxu0 0.0
    %517 = vmatpush2.msra.mxu0 0.0
    %518 = vmatprep.subr.mxu0 0.0
    %519 = vmatpush2.msra.mxu0 0.0
    %520 = vmatprep.subr.mxu0 0.0
    %521 = vmatpush2.msra.mxu0 0.0
    %522 = vmatprep.subr.mxu0 0.0
    %523 = vmatpush2.msra.mxu0 0.0
    %524 = vmatprep.subr.mxu0 0.0
    %525 = vmatpush2.msra.mxu0 0.0
    %526 = vmatprep.subr.mxu0 0.0
    %527 = vmatpush2.msra.mxu0 0.0
    %528 = vmatprep.mubr.f32.mxu0 0.0
    %529 = vmatmul.mubr.f32.gmra.mxu0 %v462
    %v530 = vpop.f32.mrf.mxu0
    %v531 = vadd.f32 0.0, %v530
    %v532 = vpop.f32.mrf.mxu0
    %533 = vdwg.mxu0
    %vm534 = vcmask 785408
    %v535 = vsel %vm534, %v360, 0
    %537 = vmatprep.subr.mxu0 0.0
    %538 = vmatpush1.msra.mxu0 0.0
    %539 = vmatprep.subr.mxu0 0.0
    %540 = vmatpush1.msra.mxu0 0.0
    %541 = vmatprep.subr.mxu0 0.0
    %542 = vmatpush1.msra.mxu0 0.0
    %543 = vmatprep.subr.mxu0 0.0
    %544 = vmatpush1.msra.mxu0 0.0
    %545 = vmatprep.subr.mxu0 0.0
    %546 = vmatpush1.msra.mxu0 %v456
    %547 = vmatprep.subr.mxu0 0.0
    %548 = vmatpush1.msra.mxu0 %v455
    %549 = vmatprep.subr.mxu0 0.0
    %550 = vmatpush1.msra.mxu0 %v454
    %551 = vmatprep.subr.mxu0 0.0
    %552 = vmatpush1.msra.mxu0 %v453
    %553 = vmatprep.subr.mxu0 0.0
    %554 = vmatpush1.msra.mxu0 %v452
    %555 = vmatprep.subr.mxu0 0.0
    %556 = vmatpush1.msra.mxu0 %v451
    %557 = vmatprep.subr.mxu0 0.0
    %558 = vmatpush1.msra.mxu0 %v450
    %559 = vmatprep.subr.mxu0 0.0
    %560 = vmatpush1.msra.mxu0 %v449
    %561 = vmatprep.subr.mxu0 0.0
    %562 = vmatpush1.msra.mxu0 %v448
    %563 = vmatprep.subr.mxu0 0.0
    %564 = vmatpush1.msra.mxu0 %v447
    %565 = vmatprep.subr.mxu0 0.0
    %566 = vmatpush1.msra.mxu0 %v446
    %567 = vmatprep.subr.mxu0 0.0
    %568 = vmatpush1.msra.mxu0 %v445
    %569 = vmatprep.subr.mxu0 0.0
    %570 = vmatpush2.msra.mxu0 0.0
    %571 = vmatprep.subr.mxu0 0.0
    %572 = vmatpush2.msra.mxu0 0.0
    %573 = vmatprep.subr.mxu0 0.0
    %574 = vmatpush2.msra.mxu0 0.0
    %575 = vmatprep.subr.mxu0 0.0
    %576 = vmatpush2.msra.mxu0 0.0
    %577 = vmatprep.subr.mxu0 0.0
    %578 = vmatpush2.msra.mxu0 0.0
    %579 = vmatprep.subr.mxu0 0.0
    %580 = vmatpush2.msra.mxu0 0.0
    %581 = vmatprep.subr.mxu0 0.0
    %582 = vmatpush2.msra.mxu0 0.0
    %583 = vmatprep.subr.mxu0 0.0
    %584 = vmatpush2.msra.mxu0 0.0
    %585 = vmatprep.subr.mxu0 0.0
    %586 = vmatpush2.msra.mxu0 0.0
    %587 = vmatprep.subr.mxu0 0.0
    %588 = vmatpush2.msra.mxu0 0.0
    %589 = vmatprep.subr.mxu0 0.0
    %590 = vmatpush2.msra.mxu0 0.0
    %591 = vmatprep.subr.mxu0 0.0
    %592 = vmatpush2.msra.mxu0 0.0
    %593 = vmatprep.subr.mxu0 0.0
    %594 = vmatpush2.msra.mxu0 0.0
    %595 = vmatprep.subr.mxu0 0.0
    %596 = vmatpush2.msra.mxu0 0.0
    %597 = vmatprep.subr.mxu0 0.0
    %598 = vmatpush2.msra.mxu0 0.0
    %599 = vmatprep.subr.mxu0 0.0
    %600 = vmatpush2.msra.mxu0 0.0
    %601 = vmatprep.mubr.f32.mxu0 0.0
    %602 = vmatmul.mubr.f32.gmra.mxu0 %v535
    %v603 = vpop.f32.mrf.mxu0
    %v604 = vadd.f32 %v531, %v603
    %v605 = vpop.f32.mrf.mxu0
    %606 = vdwg.mxu0
    %v607 = vlaneseq
    %v608 = vshrl.u32 %v607, 7
    %v609 = vsub.s32 3, %v608
    %v610 = vrot.slane %v110, %v609
    %v611 = vadd.f32 %v604, %v610
    %612 = vst [vmem:[#allocation13] sm:$0xff] %v611
    // Predicated region
    $region58: #{tpu_custom_call.1} parent=1 // pred_check
      _
    $region59: #{tpu_custom_call.1} parent=1 // pred_check_branch
      %614 = sbr.rel (0) target = $region61
    $region60: #{tpu_custom_call.1} parent=1 // pred_region
      %s616 = ssub.s32 128, 128
      %617 = vsyncadd [#allocation4], %s616
      %s619 = sshll.u32 [#allocation13], 4
      %s620 = int_to_ptr.vmem [resolvable:$true] %s619
      %622 = dma.vmem_to_hbm [thread:$0]  %s620, 128, %s8, [#allocation4]
    $region61: #{tpu_custom_call.1} parent=1 // pred_fallthru
      _
    // Predicated region
    $region62: #{tpu_custom_call.1} parent=1 // pred_check
      _
    $region63: #{tpu_custom_call.1} parent=1 // pred_check_branch
      %624 = sbr.rel (0) target = $region65
    $region64: #{tpu_custom_call.1} parent=1 // pred_region
      %625 = dma.done [#allocation4], 128
    $region65: #{tpu_custom_call.1} parent=1 // pred_fallthru
      _
    %626 = vsyncpa [#allocation3], 1
    %627 = vsyncpa [#allocation6], 1
    %628 = vsyncpa [#allocation9], 1
    %629 = vsyncpa [#allocation12], 1
    %630 = vsyncpa [#allocation4], 1

</llo_original>
